<compile_context>
chip_gen: v7x
topology: tpu7x:2x2x1
jax: 0.10.0
libtpu: 0.0.40
codegen_flags: <defaults>
</compile_context>

<pallas_src>
import numpy as np
import jax
import jax.numpy as jnp
from jax.experimental import pallas as pl
from jax.experimental.pallas import tpu as pltpu


def _round_up(x, m):
    return ((x + m - 1) // m) * m


# --------------------------------------------------------------------------
# Path A: small/medium images — circulant matmul (MXU-perfect, lane-dense).
# --------------------------------------------------------------------------
def _circ_matmul_single_kernel(y_ref, mt_ref, o_ref):
    # Whole reduction dim in one tile: write the dot result directly.
    o_ref[...] = jnp.dot(y_ref[...], mt_ref[...],
                         preferred_element_type=jnp.float32).astype(o_ref.dtype)


def _circ_matmul_tiled_kernel(y_ref, mt_ref, o_ref):
    # Output block is f32 and resident across the K axis: accumulate in place
    # (no VMEM scratch, no final copy).
    @pl.when(pl.program_id(2) == 0)
    def _():
        o_ref[...] = jnp.zeros_like(o_ref)

    o_ref[...] += jnp.dot(y_ref[...], mt_ref[...],
                          preferred_element_type=jnp.float32)


def _inverse_filter_circulant(y_flat, otf, H, W, use_bf16=False):
    """x_flat = y_flat @ M^T with M the real circulant inverse-filter operator."""
    N, HW = y_flat.shape

    # Real circular impulse response of the inverse filter.  OTF reciprocal
    # and the irfft 1/(H*W) normalization are folded in here, once.
    g = jnp.real(jnp.fft.ifft2(1.0 / otf)).astype(jnp.float32)        # (H, W)

    # M^T[(r,s),(p,q)] = g[(p-r) mod H, (q-s) mod W]  (gather with static idx)
    rr = np.arange(H)
    ss = np.arange(W)
    idx_h = (rr[None, :] - rr[:, None]) % H                           # [r, p]
    idx_w = (ss[None, :] - ss[:, None]) % W                           # [s, q]
    mt = g[idx_h[:, None, :, None], idx_w[None, :, None, :]].reshape(HW, HW)

    # Tiling: single grid step when the full operator tile is small enough,
    # else a standard (parallel, parallel, arbitrary) tiled matmul.
    single = HW <= 1024
    if single:
        HWp = _round_up(HW, 128)
        TK = TQ = HWp
    else:
        HWp = _round_up(HW, 512)
        TK, TQ = 512, 256
    Np = _round_up(N, 8)
    TN = min(Np, 128)
    Np = _round_up(Np, TN)

    op_dtype = jnp.bfloat16 if use_bf16 else jnp.float32   # bf16: v6e/v7x MXU
    if Np == N and HWp == HW:
        y_p = y_flat.astype(op_dtype)
    else:
        y_p = jnp.zeros((Np, HWp), jnp.float32).at[:N, :HW].set(
            y_flat.astype(jnp.float32)).astype(op_dtype)
    if HWp == HW:
        mt_p = mt.astype(op_dtype)
    else:
        mt_p = jnp.zeros((HWp, HWp), jnp.float32).at[:HW, :HW].set(mt).astype(op_dtype)

    ce = pl.CostEstimate(flops=2 * Np * HWp * HWp,
                         transcendentals=0,
                         bytes_accessed=4 * (2 * Np * HWp + HWp * HWp))

    if single:
        out = pl.pallas_call(
            _circ_matmul_single_kernel,
            out_shape=jax.ShapeDtypeStruct((Np, HWp), jnp.float32),
            grid_spec=pltpu.PrefetchScalarGridSpec(
                num_scalar_prefetch=0,
                grid=(Np // TN, HWp // TQ),
                in_specs=[
                    pl.BlockSpec((TN, TK), lambda i, j: (i, 0)),   # y rows
                    pl.BlockSpec((TK, TQ), lambda i, j: (0, j)),   # M^T cols
                ],
                out_specs=pl.BlockSpec((TN, TQ), lambda i, j: (i, j)),
            ),
            compiler_params=pltpu.CompilerParams(
                dimension_semantics=("parallel", "parallel")),
            cost_estimate=ce,
        )(y_p, mt_p)
    else:
        out = pl.pallas_call(
            _circ_matmul_tiled_kernel,
            out_shape=jax.ShapeDtypeStruct((Np, HWp), jnp.float32),
            grid_spec=pltpu.PrefetchScalarGridSpec(
                num_scalar_prefetch=0,
                grid=(Np // TN, HWp // TQ, HWp // TK),
                in_specs=[
                    pl.BlockSpec((TN, TK), lambda i, j, k: (i, k)),   # y tile
                    pl.BlockSpec((TK, TQ), lambda i, j, k: (k, j)),   # M^T tile
                ],
                out_specs=pl.BlockSpec((TN, TQ), lambda i, j, k: (i, j)),
            ),
            compiler_params=pltpu.CompilerParams(
                dimension_semantics=("parallel", "parallel", "arbitrary")),
            cost_estimate=ce,
        )(y_p, mt_p)

    return out[:N, :HW]


# --------------------------------------------------------------------------
# Path B: large images (HW > 4096) — dense-DFT per image, conj(OTF)/|OTF|^2
# and the 1/(H*W) scale precomputed in the wrapper (no per-image divide).
# --------------------------------------------------------------------------
def _inverse_filter_dft_kernel(y_ref, frh_ref, fih_ref, frw_ref, fiw_ref,
                               oa_ref, ob_ref, o_ref):
    y = y_ref[0].astype(jnp.float32)          # (H, W)
    frh = frh_ref[...]                        # (H, H) cos part of DFT_H
    fih = fih_ref[...]                        # (H, H) sin part of DFT_H
    frw = frw_ref[...]                        # (W, W) cos part of DFT_W
    fiw = fiw_ref[...]                        # (W, W) sin part of DFT_W

    # Forward 2D DFT of a real image:  Y = F_H @ y @ F_W   (F symmetric)
    a = jnp.dot(frh, y, preferred_element_type=jnp.float32)
    b = jnp.dot(fih, y, preferred_element_type=jnp.float32)
    yr = (jnp.dot(a, frw, preferred_element_type=jnp.float32)
          - jnp.dot(b, fiw, preferred_element_type=jnp.float32))
    yi = (jnp.dot(a, fiw, preferred_element_type=jnp.float32)
          + jnp.dot(b, frw, preferred_element_type=jnp.float32))

    # Element-wise complex multiply by precomputed conj(OTF)/|OTF|^2 / (H*W).
    oa = oa_ref[...]
    ob = ob_ref[...]
    xr = yr * oa + yi * ob
    xi = yi * oa - yr * ob

    # Inverse 2D DFT (real part); normalization already folded into oa/ob.
    c1 = (jnp.dot(frh, xr, preferred_element_type=jnp.float32)
          + jnp.dot(fih, xi, preferred_element_type=jnp.float32))
    c2 = (jnp.dot(frh, xi, preferred_element_type=jnp.float32)
          - jnp.dot(fih, xr, preferred_element_type=jnp.float32))
    x = (jnp.dot(c1, frw, preferred_element_type=jnp.float32)
         + jnp.dot(c2, fiw, preferred_element_type=jnp.float32))
    o_ref[0] = x.astype(o_ref.dtype)


def _dft_matrix_parts(n):
    """Real / imaginary parts of the n x n DFT matrix exp(-2*pi*i*j*k/n)."""
    k = np.arange(n)
    ang = -2.0 * np.pi * np.outer(k, k) / n
    return (jnp.asarray(np.cos(ang), jnp.float32),
            jnp.asarray(np.sin(ang), jnp.float32))


def _inverse_filter_dft(y_imgs, otf, H, W):
    N = y_imgs.shape[0]
    otf_r = jnp.real(otf).astype(jnp.float32)
    otf_i = jnp.imag(otf).astype(jnp.float32)
    den = otf_r * otf_r + otf_i * otf_i
    scale = jnp.float32(1.0 / (H * W))
    oa = (otf_r / den) * scale
    ob = (otf_i / den) * scale

    frh, fih = _dft_matrix_parts(H)
    frw, fiw = _dft_matrix_parts(W)

    return pl.pallas_call(
        _inverse_filter_dft_kernel,
        out_shape=jax.ShapeDtypeStruct((N, H, W), jnp.float32),
        grid_spec=pltpu.PrefetchScalarGridSpec(
            num_scalar_prefetch=0,
            grid=(N,),
            in_specs=[
                pl.BlockSpec((1, H, W), lambda i: (i, 0, 0)),   # y image i
                pl.BlockSpec((H, H), lambda i: (0, 0)),          # cos DFT_H
                pl.BlockSpec((H, H), lambda i: (0, 0)),          # sin DFT_H
                pl.BlockSpec((W, W), lambda i: (0, 0)),          # cos DFT_W
                pl.BlockSpec((W, W), lambda i: (0, 0)),          # sin DFT_W
                pl.BlockSpec((H, W), lambda i: (0, 0)),          # oa
                pl.BlockSpec((H, W), lambda i: (0, 0)),          # ob
            ],
            out_specs=pl.BlockSpec((1, H, W), lambda i: (i, 0, 0)),
        ),
        compiler_params=pltpu.CompilerParams(
            dimension_semantics=("parallel",)),
    )(y_imgs.astype(jnp.float32), frh, fih, frw, fiw, oa, ob)


# --------------------------------------------------------------------------
# Public wrapper (matches InverseFilter.forward semantics).
# --------------------------------------------------------------------------
def inverse_filter(y, kernel, use_bf16=False):
    """Pallas implementation of InverseFilter.forward.  y: (B, C, H, W)."""
    assert y.ndim == 4
    B, C, H, W = y.shape
    kh, kw = kernel.shape[-2], kernel.shape[-1]

    # --- one-time parameter setup (plain JAX glue): padded, rolled PSF, OTF ---
    psf = jnp.zeros((H, W), jnp.float32)
    psf = psf.at[:kh, :kw].set(kernel.astype(jnp.float32))
    psf = jnp.roll(psf, (-(kh // 2), -(kw // 2)), axis=(-2, -1))
    otf = jnp.fft.fft2(psf)                       # full-spectrum OTF

    N = B * C
    if H * W <= 4096:   # up to 64x64: the (HW)^2 circulant operator is cheap
        out = _inverse_filter_circulant(
            y.reshape(N, H * W), otf, H, W, use_bf16=use_bf16)
    else:
        out = _inverse_filter_dft(y.reshape(N, H, W), otf, H, W)

    return out.reshape(B, C, H, W).astype(y.dtype)


def _reference(y, kernel):
    """Pure-JAX replica of the PyTorch forward (rfft2 / irfft2 path)."""
    H, W = y.shape[-2], y.shape[-1]
    kh, kw = kernel.shape[-2], kernel.shape[-1]
    psf = jnp.zeros((H, W), y.dtype)
    psf = psf.at[:kh, :kw].set(kernel.astype(y.dtype))
    psf = jnp.roll(psf, (-(kh // 2), -(kw // 2)), axis=(-2, -1))
    x_hat = jnp.fft.rfft2(y, axes=(-2, -1))
    otf = jnp.fft.rfft2(psf, axes=(-2, -1))
    x_hat = x_hat / otf
    return jnp.fft.irfft2(x_hat, s=(H, W), axes=(-2, -1)).astype(y.dtype)


if __name__ == "__main__":
    B, C, H, W = 2, 4, 16, 16

    # Deterministic, well-conditioned 3x3 blur kernel (|OTF| bounded away
    # from zero so the inverse filter is numerically sane).
    kernel = np.full((3, 3), 0.025, dtype=np.float32)
    kernel[1, 1] = 0.8
    kernel = jnp.asarray(kernel)

    key = jax.random.PRNGKey(0)
    y = jax.random.normal(key, (B, C, H, W), dtype=jnp.float32)

    out = inverse_filter(y, kernel)          # f32 operands (tolerance-safe);
    out = jax.block_until_ready(out)         # use_bf16=True for v6e/v7x MXU.

    ref = _reference(y, kernel)
    err = float(jnp.max(jnp.abs(out - ref)))
    assert out.shape == (B, C, H, W) and out.dtype == jnp.float32
    assert err < 5e-3, f"max abs err {err}"

    print("KERNEL_OK")
</pallas_src>

<mosaic_0001>
module attributes {stable_mosaic.version = 11 : i64} {
  func.func @_circ_matmul_single_kernel(%arg0: i32, %arg1: i32, %arg2: memref<8x256xf32, #tpu.memory_space<vmem>>, %arg3: memref<256x256xf32, #tpu.memory_space<vmem>>, %arg4: memref<8x256xf32, #tpu.memory_space<vmem>>) attributes {dimension_semantics = [#tpu.dimension_semantics<parallel>, #tpu.dimension_semantics<parallel>], iteration_bounds = array<i64: 1, 1>, scalar_prefetch = 0 : i64, scratch_operands = 0 : i64, tpu.core_type = #tpu.core_type<tc>, window_params = [{transform_indices = @transform_0, window_bounds = array<i64: 8, 256>}, {transform_indices = @transform_1, window_bounds = array<i64: 256, 256>}, {transform_indices = @transform_2, window_bounds = array<i64: 8, 256>}]} {
    %c0 = arith.constant 0 : index
    %c0_0 = arith.constant 0 : index
    %0 = vector.load %arg2[%c0, %c0_0] : memref<8x256xf32, #tpu.memory_space<vmem>>, vector<8x256xf32>
    %c0_1 = arith.constant 0 : index
    %c0_2 = arith.constant 0 : index
    %1 = vector.load %arg3[%c0_1, %c0_2] : memref<256x256xf32, #tpu.memory_space<vmem>>, vector<256x256xf32>
    %cst = arith.constant dense<0.000000e+00> : vector<8x256xf32>
    %2 = tpu.matmul %0, %1, %cst {dimension_numbers = #tpu.dot_dimension_numbers<[1], [0], [0], [1], [0, 0, 1, 1], [], []>} : vector<8x256xf32>, vector<256x256xf32>, vector<8x256xf32> -> vector<8x256xf32>
    %c0_3 = arith.constant 0 : index
    %c0_4 = arith.constant 0 : index
    %3 = vector.load %arg4[%c0_3, %c0_4] : memref<8x256xf32, #tpu.memory_space<vmem>>, vector<8x256xf32>
    tpu.vector_store %arg4[%c0_3, %c0_4], %2 {strides = array<i32>} : memref<8x256xf32, #tpu.memory_space<vmem>>, vector<8x256xf32>,
    return
  }
  func.func @transform_0(%arg0: i32, %arg1: i32) -> (i32, i32) {
    %c0_i32 = arith.constant 0 : i32
    %c0_i32_0 = arith.constant 0 : i32
    return %arg0, %c0_i32 : i32, i32
  }
  func.func @transform_1(%arg0: i32, %arg1: i32) -> (i32, i32) {
    %c0_i32 = arith.constant 0 : i32
    %c0_i32_0 = arith.constant 0 : i32
    return %c0_i32, %arg1 : i32, i32
  }
  func.func @transform_2(%arg0: i32, %arg1: i32) -> (i32, i32) {
    %c0_i32 = arith.constant 0 : i32
    return %arg0, %arg1 : i32, i32
  }
}

</mosaic_0001>

<llo_original>
// kernel: tpu_custom_call.1
$region0: #{tpu_custom_call.1}
  #allocation0 [shape = 'u32[]', space=smem, size = 0x4, offset = 0x4, fixed_abs, tag = 'smem constant byte address 0x4 - core index']
  #allocation1 [shape = 'u32[144,128]{1,0:T(1,128)}', space=vmem, size = 0x12000, scoped, tag = 'internal scratch']
  %s0 = inlined_call_operand.hbm [shape: f32[8,256], index: 0, kind: input, shape index: {}]
  %s1 = inlined_call_operand.hbm [shape: f32[256,256], index: 1, kind: input, shape index: {}]
  %s2 = inlined_call_operand.hbm [shape: f32[8,256], index: 2, kind: output, shape index: {}]
  %s3 = sld [smem:[#allocation0]]
  $region26: #{tpu_custom_call.1} parent=0
    _
  %s5 = ssub.s32 1, %s3
  %s6 = scalar_select 0, %s5, %s3
  $region1: #{tpu_custom_call.1} parent=0
    #allocation2 [shape = 'u8[8192]{0}', space=vmem, size = 0x2000, scoped, tag = 'input window, operand 0, single buffered']
    #allocation3 [shape = 's32[1]{0}', space=sflag, size = 0x4, scoped, tag = 'scoped memory for tpu_custom_call.1']
    #allocation4 [shape = 's32[1]{0}', space=sflag, size = 0x4, scoped, tag = 'scoped memory for tpu_custom_call.1']
    #allocation5 [shape = 'u8[262144]{0}', space=vmem, size = 0x40000, scoped, tag = 'input window, operand 1, single buffered']
    #allocation6 [shape = 's32[1]{0}', space=sflag, size = 0x4, scoped, tag = 'scoped memory for tpu_custom_call.1']
    #allocation7 [shape = 'u8[8192]{0}', space=vmem, size = 0x2000, scoped, tag = 'output window, operand 0, single buffered']
    %7 = vsyncpa [#allocation3], 0
    %8 = vsyncpa [#allocation6], 0
    %9 = vsyncpa [#allocation4], 0
    // Predicated region
    $region2: #{tpu_custom_call.1} parent=1 // pred_check
      _
    $region3: #{tpu_custom_call.1} parent=1 // pred_check_branch
      %11 = sbr.rel (0) target = $region5
    $region4: #{tpu_custom_call.1} parent=1 // pred_region
      %s13 = ssub.s32 256, 256
      %14 = vsyncadd [#allocation3], %s13
      %s16 = sshll.u32 [#allocation2], 4
      %s17 = int_to_ptr.vmem [resolvable:$true] %s16
      %19 = dma.hbm_to_vmem [thread:$0]  %s0, 256, %s17, [#allocation3]
    $region5: #{tpu_custom_call.1} parent=1 // pred_fallthru
      _
    // Predicated region
    $region6: #{tpu_custom_call.1} parent=1 // pred_check
      _
    $region7: #{tpu_custom_call.1} parent=1 // pred_check_branch
      %21 = sbr.rel (0) target = $region9
    $region8: #{tpu_custom_call.1} parent=1 // pred_region
      %s23 = ssub.s32 8192, 8192
      %24 = vsyncadd [#allocation6], %s23
      %s25 = sshll.u32 [#allocation5], 4
      %s26 = int_to_ptr.vmem [resolvable:$true] %s25
      %31 = dma.hbm_to_vmem [thread:$0]  %s1, 8192, %s26, [#allocation6], 256, 256, 16
    $region9: #{tpu_custom_call.1} parent=1 // pred_fallthru
      _
    // Predicated region
    $region10: #{tpu_custom_call.1} parent=1 // pred_check
      _
    $region11: #{tpu_custom_call.1} parent=1 // pred_check_branch
      %33 = sbr.rel (0) target = $region13
    $region12: #{tpu_custom_call.1} parent=1 // pred_region
      %34 = dma.done [#allocation3], 256
    $region13: #{tpu_custom_call.1} parent=1 // pred_fallthru
      _
    // Predicated region
    $region14: #{tpu_custom_call.1} parent=1 // pred_check
      _
    $region15: #{tpu_custom_call.1} parent=1 // pred_check_branch
      %36 = sbr.rel (0) target = $region17
    $region16: #{tpu_custom_call.1} parent=1 // pred_region
      %37 = dma.done [#allocation6], 8192
    $region17: #{tpu_custom_call.1} parent=1 // pred_fallthru
      _
    %v38 = vld [vmem:[#allocation2] sm:$0xff]
    %v39 = vld [vmem:[#allocation2 + $0x8] sm:$0xff]
    %v40 = vld [vmem:[#allocation5] sm:$0xff]
    %v41 = vld [vmem:[#allocation5 + $0x8] sm:$0xff]
    %v42 = vld [vmem:[#allocation5 + $0x10] sm:$0xff]
    %v43 = vld [vmem:[#allocation5 + $0x18] sm:$0xff]
    %v44 = vld [vmem:[#allocation5 + $0x20] sm:$0xff]
    %v45 = vld [vmem:[#allocation5 + $0x28] sm:$0xff]
    %v46 = vld [vmem:[#allocation5 + $0x30] sm:$0xff]
    %v47 = vld [vmem:[#allocation5 + $0x38] sm:$0xff]
    %v48 = vld [vmem:[#allocation5 + $0x40] sm:$0xff]
    %v49 = vld [vmem:[#allocation5 + $0x48] sm:$0xff]
    %v50 = vld [vmem:[#allocation5 + $0x50] sm:$0xff]
    %v51 = vld [vmem:[#allocation5 + $0x58] sm:$0xff]
    %v52 = vld [vmem:[#allocation5 + $0x60] sm:$0xff]
    %v53 = vld [vmem:[#allocation5 + $0x68] sm:$0xff]
    %v54 = vld [vmem:[#allocation5 + $0x70] sm:$0xff]
    %v55 = vld [vmem:[#allocation5 + $0x78] sm:$0xff]
    %v56 = vld [vmem:[#allocation5 + $0x80] sm:$0xff]
    %v57 = vld [vmem:[#allocation5 + $0x88] sm:$0xff]
    %v58 = vld [vmem:[#allocation5 + $0x90] sm:$0xff]
    %v59 = vld [vmem:[#allocation5 + $0x98] sm:$0xff]
    %v60 = vld [vmem:[#allocation5 + $0xa0] sm:$0xff]
    %v61 = vld [vmem:[#allocation5 + $0xa8] sm:$0xff]
    %v62 = vld [vmem:[#allocation5 + $0xb0] sm:$0xff]
    %v63 = vld [vmem:[#allocation5 + $0xb8] sm:$0xff]
    %v64 = vld [vmem:[#allocation5 + $0xc0] sm:$0xff]
    %v65 = vld [vmem:[#allocation5 + $0xc8] sm:$0xff]
    %v66 = vld [vmem:[#allocation5 + $0xd0] sm:$0xff]
    %v67 = vld [vmem:[#allocation5 + $0xd8] sm:$0xff]
    %v68 = vld [vmem:[#allocation5 + $0xe0] sm:$0xff]
    %v69 = vld [vmem:[#allocation5 + $0xe8] sm:$0xff]
    %v70 = vld [vmem:[#allocation5 + $0xf0] sm:$0xff]
    %v71 = vld [vmem:[#allocation5 + $0xf8] sm:$0xff]
    %v72 = vld [vmem:[#allocation5 + $0x100] sm:$0xff]
    %v73 = vld [vmem:[#allocation5 + $0x108] sm:$0xff]
    %v74 = vld [vmem:[#allocation5 + $0x110] sm:$0xff]
    %v75 = vld [vmem:[#allocation5 + $0x118] sm:$0xff]
    %v76 = vld [vmem:[#allocation5 + $0x120] sm:$0xff]
    %v77 = vld [vmem:[#allocation5 + $0x128] sm:$0xff]
    %v78 = vld [vmem:[#allocation5 + $0x130] sm:$0xff]
    %v79 = vld [vmem:[#allocation5 + $0x138] sm:$0xff]
    %v80 = vld [vmem:[#allocation5 + $0x140] sm:$0xff]
    %v81 = vld [vmem:[#allocation5 + $0x148] sm:$0xff]
    %v82 = vld [vmem:[#allocation5 + $0x150] sm:$0xff]
    %v83 = vld [vmem:[#allocation5 + $0x158] sm:$0xff]
    %v84 = vld [vmem:[#allocation5 + $0x160] sm:$0xff]
    %v85 = vld [vmem:[#allocation5 + $0x168] sm:$0xff]
    %v86 = vld [vmem:[#allocation5 + $0x170] sm:$0xff]
    %v87 = vld [vmem:[#allocation5 + $0x178] sm:$0xff]
    %v88 = vld [vmem:[#allocation5 + $0x180] sm:$0xff]
    %v89 = vld [vmem:[#allocation5 + $0x188] sm:$0xff]
    %v90 = vld [vmem:[#allocation5 + $0x190] sm:$0xff]
    %v91 = vld [vmem:[#allocation5 + $0x198] sm:$0xff]
    %v92 = vld [vmem:[#allocation5 + $0x1a0] sm:$0xff]
    %v93 = vld [vmem:[#allocation5 + $0x1a8] sm:$0xff]
    %v94 = vld [vmem:[#allocation5 + $0x1b0] sm:$0xff]
    %v95 = vld [vmem:[#allocation5 + $0x1b8] sm:$0xff]
    %v96 = vld [vmem:[#allocation5 + $0x1c0] sm:$0xff]
    %v97 = vld [vmem:[#allocation5 + $0x1c8] sm:$0xff]
    %v98 = vld [vmem:[#allocation5 + $0x1d0] sm:$0xff]
    %v99 = vld [vmem:[#allocation5 + $0x1d8] sm:$0xff]
    %v100 = vld [vmem:[#allocation5 + $0x1e0] sm:$0xff]
    %v101 = vld [vmem:[#allocation5 + $0x1e8] sm:$0xff]
    %v102 = vld [vmem:[#allocation5 + $0x1f0] sm:$0xff]
    %v103 = vld [vmem:[#allocation5 + $0x1f8] sm:$0xff]
    %104 = vmatprep.subr.mxu0 %v41
    %105 = vmatpush1.msra.mxu0 %v40
    %106 = vmatprep.subr.mxu0 %v43
    %107 = vmatpush1.msra.mxu0 %v42
    %108 = vmatprep.subr.mxu0 %v45
    %109 = vmatpush1.msra.mxu0 %v44
    %110 = vmatprep.subr.mxu0 %v47
    %111 = vmatpush1.msra.mxu0 %v46
    %112 = vmatprep.subr.mxu0 %v49
    %113 = vmatpush1.msra.mxu0 %v48
    %114 = vmatprep.subr.mxu0 %v51
    %115 = vmatpush1.msra.mxu0 %v50
    %116 = vmatprep.subr.mxu0 %v53
    %117 = vmatpush1.msra.mxu0 %v52
    %118 = vmatprep.subr.mxu0 %v55
    %119 = vmatpush1.msra.mxu0 %v54
    %120 = vmatprep.subr.mxu0 %v57
    %121 = vmatpush1.msra.mxu0 %v56
    %122 = vmatprep.subr.mxu0 %v59
    %123 = vmatpush1.msra.mxu0 %v58
    %124 = vmatprep.subr.mxu0 %v61
    %125 = vmatpush1.msra.mxu0 %v60
    %126 = vmatprep.subr.mxu0 %v63
    %127 = vmatpush1.msra.mxu0 %v62
    %128 = vmatprep.subr.mxu0 %v65
    %129 = vmatpush1.msra.mxu0 %v64
    %130 = vmatprep.subr.mxu0 %v67
    %131 = vmatpush1.msra.mxu0 %v66
    %132 = vmatprep.subr.mxu0 %v69
    %133 = vmatpush1.msra.mxu0 %v68
    %134 = vmatprep.subr.mxu0 %v71
    %135 = vmatpush1.msra.mxu0 %v70
    %136 = vmatprep.subr.mxu0 %v73
    %137 = vmatpush1.msra.mxu0 %v72
    %138 = vmatprep.subr.mxu0 %v75
    %139 = vmatpush1.msra.mxu0 %v74
    %140 = vmatprep.subr.mxu0 %v77
    %141 = vmatpush1.msra.mxu0 %v76
    %142 = vmatprep.subr.mxu0 %v79
    %143 = vmatpush1.msra.mxu0 %v78
    %144 = vmatprep.subr.mxu0 %v81
    %145 = vmatpush1.msra.mxu0 %v80
    %146 = vmatprep.subr.mxu0 %v83
    %147 = vmatpush1.msra.mxu0 %v82
    %148 = vmatprep.subr.mxu0 %v85
    %149 = vmatpush1.msra.mxu0 %v84
    %150 = vmatprep.subr.mxu0 %v87
    %151 = vmatpush1.msra.mxu0 %v86
    %152 = vmatprep.subr.mxu0 %v89
    %153 = vmatpush1.msra.mxu0 %v88
    %154 = vmatprep.subr.mxu0 %v91
    %155 = vmatpush1.msra.mxu0 %v90
    %156 = vmatprep.subr.mxu0 %v93
    %157 = vmatpush1.msra.mxu0 %v92
    %158 = vmatprep.subr.mxu0 %v95
    %159 = vmatpush1.msra.mxu0 %v94
    %160 = vmatprep.subr.mxu0 %v97
    %161 = vmatpush1.msra.mxu0 %v96
    %162 = vmatprep.subr.mxu0 %v99
    %163 = vmatpush1.msra.mxu0 %v98
    %164 = vmatprep.subr.mxu0 %v101
    %165 = vmatpush1.msra.mxu0 %v100
    %166 = vmatprep.subr.mxu0 %v103
    %167 = vmatpush1.msra.mxu0 %v102
    %168 = vmatprep.mubr.f32.mxu0 %v39
    %169 = vmatmul.mubr.f32.gmra.mrb[0].mxu0 %v38
    %v170 = vpop.f32.mrb[0].mxu0
    %v171 = vadd.f32 0.0, %v170
    %v172 = vpop.f32.mrb[0].mxu0
    %v173 = vadd.f32 0.0, %v172
    %174 = vdwg.mxu0
    %175 = vst [vmem:[#allocation7] sm:$0xff] %v171
    %176 = vst [vmem:[#allocation7 + $0x8] sm:$0xff] %v173
    // Predicated region
    $region18: #{tpu_custom_call.1} parent=1 // pred_check
      _
    $region19: #{tpu_custom_call.1} parent=1 // pred_check_branch
      %178 = sbr.rel (0) target = $region21
    $region20: #{tpu_custom_call.1} parent=1 // pred_region
      %s180 = ssub.s32 256, 256
      %181 = vsyncadd [#allocation4], %s180
      %s183 = sshll.u32 [#allocation7], 4
      %s184 = int_to_ptr.vmem [resolvable:$true] %s183
      %186 = dma.vmem_to_hbm [thread:$0]  %s184, 256, %s2, [#allocation4]
    $region21: #{tpu_custom_call.1} parent=1 // pred_fallthru
      _
    // Predicated region
    $region22: #{tpu_custom_call.1} parent=1 // pred_check
      _
    $region23: #{tpu_custom_call.1} parent=1 // pred_check_branch
      %188 = sbr.rel (0) target = $region25
    $region24: #{tpu_custom_call.1} parent=1 // pred_region
      %189 = dma.done [#allocation4], 256
    $region25: #{tpu_custom_call.1} parent=1 // pred_fallthru
      _
    %190 = vsyncpa [#allocation3], 1
    %191 = vsyncpa [#allocation6], 1
    %192 = vsyncpa [#allocation4], 1

</llo_original>
